<compile_context>
chip_gen: v6e
topology: v6e:2x2x1
jax: 0.10.0
libtpu: 0.0.40
codegen_flags: <defaults>
</compile_context>

<pallas_src>
import jax
import jax.numpy as jnp
from jax import lax
from jax.experimental import pallas as pl
from jax.experimental.pallas import tpu as pltpu


def _round_up(n: int, m: int) -> int:
    return (n + m - 1) // m * m


# ----------------------------------------------------------------------------
# Kernel body: one batch tile -> normalize -> Linear1 + leaky_relu -> Linear2
# ----------------------------------------------------------------------------
def encoder_kernel(x_ref, w1_ref, b1_ref, w2_ref, b2_ref, o_ref):
    # ---- F.normalize(X, p=2, dim=1, eps=1e-12) ----
    x = x_ref[...].astype(jnp.float32)
    sq = jnp.sum(x * x, axis=1, keepdims=True)
    # rsqrt on the EUP slot; max(sq, 1e-24) == max(sqrt(sq), 1e-12) (monotone).
    inv_norm = lax.rsqrt(jnp.maximum(sq, 1e-24))
    # Feed the MXU in the (prepared) weight dtype (bf16 by default for f32).
    xn = (x * inv_norm).astype(w1_ref.dtype)

    # ---- Linear(input_dim -> hidden_dim) + leaky_relu(0.01), f32 acc ----
    h = jnp.dot(xn, w1_ref[...], preferred_element_type=jnp.float32) + b1_ref[...]
    h = jnp.where(h >= 0, h, 0.01 * h)

    # ---- Linear(hidden_dim -> latent_dim), f32 acc ----
    out = jnp.dot(h.astype(w2_ref.dtype), w2_ref[...],
                  preferred_element_type=jnp.float32) + b2_ref[...]
    o_ref[...] = out.astype(o_ref.dtype)


# ----------------------------------------------------------------------------
# One-time parameter preparation (hoisted out of the per-step forward).
# ----------------------------------------------------------------------------
def prepare_encoder_params(w1, b1, w2, b2, *, mxu_dtype=None):
    """Transpose to (in, out), cast matmul operands, biases as f32 rows.

    w1: (hidden_dim, input_dim), b1: (hidden_dim,)   -- torch nn.Linear layout
    w2: (latent_dim, hidden_dim), b2: (latent_dim,)
    """
    if mxu_dtype is None:
        # bf16 operands cut MXU passes ~3x and halve weight DMA/VMEM; keep
        # f32 accumulation in-kernel. Pass mxu_dtype=jnp.float32 for parity
        # with a full-f32 reference.
        mxu_dtype = jnp.bfloat16 if w1.dtype == jnp.float32 else w1.dtype
    w1_t = w1.T.astype(mxu_dtype)                       # (input_dim, hidden_dim)
    w2_t = w2.T.astype(mxu_dtype)                       # (hidden_dim, latent_dim)
    b1_r = b1.astype(jnp.float32).reshape(1, -1)        # (1, hidden_dim)
    b2_r = b2.astype(jnp.float32).reshape(1, -1)        # (1, latent_dim)
    return (w1_t, b1_r, w2_t, b2_r)


def _choose_tile_b(B, input_dim, hidden_dim, latent_dim, x_itemsize, weight_bytes):
    # ~2 MiB x block per grid step so DMA dwarfs the ~0.35us per-step overhead.
    x_block_budget = 2 * 1024 * 1024
    tile = x_block_budget // max(1, input_dim * x_itemsize)

    # Generation-aware VMEM budget: v7x is the tightest (64 MiB physical,
    # 32 MiB scoped default). Keep double-buffered x/out + single-buffered
    # weights + f32 intermediates <= ~40 MiB and raise the scoped limit.
    vmem_budget = 40 * 1024 * 1024
    per_row = (2 * input_dim * x_itemsize               # x, double-buffered
               + 2 * latent_dim * x_itemsize            # out, double-buffered
               + (2 * input_dim + hidden_dim + latent_dim) * 4)  # f32 temps
    max_rows = (vmem_budget - weight_bytes) // max(1, per_row)
    # TODO(synk): if the weights alone exceed the VMEM budget (very large
    # input/hidden dims on v7x), switch to a k-tiled reduction grid axis over
    # input_dim with an f32 acc scratch instead of shrinking tile_b.
    tile = min(tile, max(8, max_rows))

    # Never bigger than the (8-rounded) batch.
    tile = min(tile, _round_up(B, 8))

    # v7x megacore: keep >=2 grid steps when the batch allows it.
    if B >= 16 and tile >= B:
        tile = (B + 1) // 2

    return max(8, _round_up(tile, 8))


# ----------------------------------------------------------------------------
# Forward pass on prepared params.
# ----------------------------------------------------------------------------
def encoder_forward(x, params, *, tile_b=None):
    """x: (B, input_dim); params from prepare_encoder_params()."""
    w1_t, b1_r, w2_t, b2_r = params
    B, input_dim = x.shape
    hidden_dim = w1_t.shape[1]
    latent_dim = w2_t.shape[1]
    dtype = x.dtype

    x_itemsize = jnp.dtype(dtype).itemsize
    w_itemsize = jnp.dtype(w1_t.dtype).itemsize
    weight_bytes = (w1_t.size + w2_t.size) * w_itemsize + (b1_r.size + b2_r.size) * 4

    if tile_b is None:
        tile_b = _choose_tile_b(B, input_dim, hidden_dim, latent_dim,
                                x_itemsize, weight_bytes)
    tile_b = max(8, _round_up(tile_b, 8))

    grid = (pl.cdiv(B, tile_b),)   # ragged last block handled by Pallas

    # Explicit scoped-VMEM limit derived from the actual working set
    # (defaults: 16 MiB v5e, 32 MiB v6e/v7x); capped below v7x's 64 MiB.
    per_step_bytes = (2 * tile_b * input_dim * x_itemsize
                      + 2 * tile_b * latent_dim * x_itemsize
                      + tile_b * (2 * input_dim + hidden_dim + latent_dim) * 4
                      + weight_bytes)
    vmem_limit = int(min(56 * 1024 * 1024,
                         max(32 * 1024 * 1024,
                             per_step_bytes * 5 // 4 + (4 << 20))))

    cost = pl.CostEstimate(
        flops=2 * B * (input_dim * hidden_dim + hidden_dim * latent_dim)
        + 3 * B * input_dim,
        transcendentals=B,
        bytes_accessed=(x.size + B * latent_dim) * x_itemsize + weight_bytes,
    )

    # Weights/biases are grid-invariant -> single-buffer them; only the x and
    # out tiles consume double-buffered VMEM.
    inv = dict(pipeline_mode=pl.Buffered(1))

    out = pl.pallas_call(
        encoder_kernel,
        out_shape=jax.ShapeDtypeStruct((B, latent_dim), dtype),
        grid_spec=pltpu.PrefetchScalarGridSpec(
            num_scalar_prefetch=0,
            grid=grid,
            in_specs=[
                pl.BlockSpec((tile_b, input_dim), lambda i: (i, 0)),
                pl.BlockSpec((input_dim, hidden_dim), lambda i: (0, 0), **inv),
                pl.BlockSpec((1, hidden_dim), lambda i: (0, 0), **inv),
                pl.BlockSpec((hidden_dim, latent_dim), lambda i: (0, 0), **inv),
                pl.BlockSpec((1, latent_dim), lambda i: (0, 0), **inv),
            ],
            out_specs=pl.BlockSpec((tile_b, latent_dim), lambda i: (i, 0)),
        ),
        compiler_params=pltpu.CompilerParams(
            dimension_semantics=("parallel",),
            vmem_limit_bytes=vmem_limit,
        ),
        cost_estimate=cost,
    )(x, w1_t, b1_r, w2_t, b2_r)

    return out


def encoder_forward_torch_layout(x, w1, b1, w2, b2, *, mxu_dtype=None, tile_b=None):
    """Convenience wrapper: accepts raw torch-layout weights (preps per call)."""
    params = prepare_encoder_params(w1, b1, w2, b2, mxu_dtype=mxu_dtype)
    return encoder_forward(x, params, tile_b=tile_b)


def encoder_reference(x, w1, b1, w2, b2):
    """Pure-JAX reference matching the PyTorch forward."""
    x = x.astype(jnp.float32)
    norm = jnp.sqrt(jnp.sum(x * x, axis=1, keepdims=True))
    xn = x / jnp.maximum(norm, 1e-12)
    h = xn @ w1.T.astype(jnp.float32) + b1
    h = jnp.where(h >= 0, h, 0.01 * h)
    return h @ w2.T.astype(jnp.float32) + b2


if __name__ == "__main__":
    # Small shapes consistent with Encoder(input_dim, hidden_dim, latent_dim).
    batch, input_dim, hidden_dim, latent_dim = 8, 32, 64, 16

    key = jax.random.PRNGKey(0)
    kx, kw1, kb1, kw2, kb2, kx2 = jax.random.split(key, 6)

    x = jax.random.normal(kx, (batch, input_dim), dtype=jnp.float32)

    # Deterministic parameter init (torch.nn.Linear-style uniform bounds).
    bound1 = 1.0 / (input_dim ** 0.5)
    w1 = jax.random.uniform(kw1, (hidden_dim, input_dim), jnp.float32, -bound1, bound1)
    b1 = jax.random.uniform(kb1, (hidden_dim,), jnp.float32, -bound1, bound1)
    bound2 = 1.0 / (hidden_dim ** 0.5)
    w2 = jax.random.uniform(kw2, (latent_dim, hidden_dim), jnp.float32, -bound2, bound2)
    b2 = jax.random.uniform(kb2, (latent_dim,), jnp.float32, -bound2, bound2)

    ref = encoder_reference(x, w1, b1, w2, b2)

    # 1) Exact path (f32 MXU operands) vs f32 reference, tight tolerance.
    params_f32 = prepare_encoder_params(w1, b1, w2, b2, mxu_dtype=jnp.float32)
    out = jax.block_until_ready(encoder_forward(x, params_f32))
    assert out.shape == (batch, latent_dim)
    assert jnp.allclose(out, ref, atol=1e-5, rtol=1e-5), "f32 path mismatch"

    # 2) Fast path (default bf16 MXU operands, f32 accumulation), loose tol.
    params_fast = prepare_encoder_params(w1, b1, w2, b2)
    out_fast = jax.block_until_ready(encoder_forward(x, params_fast))
    assert out_fast.shape == (batch, latent_dim)
    assert jnp.allclose(out_fast, ref, atol=3e-2, rtol=3e-2), "bf16 path mismatch"

    # 3) Ragged batch / multi-step grid (exercises the pl.cdiv grid + masked
    #    last block) with the exact path.
    batch2 = 37
    x2 = jax.random.normal(kx2, (batch2, input_dim), dtype=jnp.float32)
    out2 = jax.block_until_ready(encoder_forward(x2, params_f32))
    ref2 = encoder_reference(x2, w1, b1, w2, b2)
    assert out2.shape == (batch2, latent_dim)
    assert jnp.allclose(out2, ref2, atol=1e-5, rtol=1e-5), "ragged batch mismatch"

    print("KERNEL_OK")
</pallas_src>

<mosaic_0001>
module attributes {stable_mosaic.version = 11 : i64} {
  func.func @encoder_kernel(%arg0: i32, %arg1: memref<8x32xf32, #tpu.memory_space<vmem>>, %arg2: memref<32x64xf32, #tpu.memory_space<vmem>>, %arg3: memref<1x64xf32, #tpu.memory_space<vmem>>, %arg4: memref<64x16xf32, #tpu.memory_space<vmem>>, %arg5: memref<1x16xf32, #tpu.memory_space<vmem>>, %arg6: memref<8x16xf32, #tpu.memory_space<vmem>>) attributes {dimension_semantics = [#tpu.dimension_semantics<parallel>], iteration_bounds = array<i64: 1>, scalar_prefetch = 0 : i64, scratch_operands = 0 : i64, tpu.core_type = #tpu.core_type<tc>, window_params = [{transform_indices = @transform_0, window_bounds = array<i64: 8, 32>}, {pipeline_mode = #tpu.pipeline_mode<synchronous>, transform_indices = @transform_1, window_bounds = array<i64: 32, 64>}, {pipeline_mode = #tpu.pipeline_mode<synchronous>, transform_indices = @transform_2, window_bounds = array<i64: 1, 64>}, {pipeline_mode = #tpu.pipeline_mode<synchronous>, transform_indices = @transform_3, window_bounds = array<i64: 64, 16>}, {pipeline_mode = #tpu.pipeline_mode<synchronous>, transform_indices = @transform_4, window_bounds = array<i64: 1, 16>}, {transform_indices = @transform_5, window_bounds = array<i64: 8, 16>}]} {
    %c0 = arith.constant 0 : index
    %c0_0 = arith.constant 0 : index
    %0 = vector.load %arg1[%c0, %c0_0] : memref<8x32xf32, #tpu.memory_space<vmem>>, vector<8x32xf32>
    %1 = arith.mulf %0, %0 : vector<8x32xf32>
    %cst = arith.constant dense<0.000000e+00> : vector<8xf32>
    %2 = vector.multi_reduction <add>, %1, %cst [1] : vector<8x32xf32> to vector<8xf32>
    %3 = vector.shape_cast %2 : vector<8xf32> to vector<8x1xf32>
    %cst_1 = arith.constant 1.000000e-24 : f32
    %4 = vector.broadcast %cst_1 : f32 to vector<8x1xf32>
    %5 = arith.maximumf %3, %4 : vector<8x1xf32>
    %6 = math.rsqrt %5 : vector<8x1xf32>
    %7 = vector.broadcast %6 : vector<8x1xf32> to vector<8x32xf32>
    %8 = arith.mulf %0, %7 : vector<8x32xf32>
    %c0_2 = arith.constant 0 : index
    %c0_3 = arith.constant 0 : index
    %9 = vector.load %arg2[%c0_2, %c0_3] : memref<32x64xf32, #tpu.memory_space<vmem>>, vector<32x64xf32>
    %cst_4 = arith.constant dense<0.000000e+00> : vector<8x64xf32>
    %10 = tpu.matmul %8, %9, %cst_4 {dimension_numbers = #tpu.dot_dimension_numbers<[1], [0], [0], [1], [0, 0, 1, 1], [], []>} : vector<8x32xf32>, vector<32x64xf32>, vector<8x64xf32> -> vector<8x64xf32>
    %c0_5 = arith.constant 0 : index
    %c0_6 = arith.constant 0 : index
    %11 = vector.load %arg3[%c0_5, %c0_6] : memref<1x64xf32, #tpu.memory_space<vmem>>, vector<1x64xf32>
    %12 = vector.broadcast %11 : vector<1x64xf32> to vector<8x64xf32>
    %13 = arith.addf %10, %12 : vector<8x64xf32>
    %cst_7 = arith.constant 0.000000e+00 : f32
    %14 = vector.broadcast %cst_7 : f32 to vector<8x64xf32>
    %15 = arith.cmpf oge, %13, %14 : vector<8x64xf32>
    %cst_8 = arith.constant 0.00999999977 : f32
    %16 = vector.broadcast %cst_8 : f32 to vector<8x64xf32>
    %17 = arith.mulf %16, %13 : vector<8x64xf32>
    %18 = arith.select %15, %13, %17 : vector<8x64xi1>, vector<8x64xf32>
    %c0_9 = arith.constant 0 : index
    %c0_10 = arith.constant 0 : index
    %19 = vector.load %arg4[%c0_9, %c0_10] : memref<64x16xf32, #tpu.memory_space<vmem>>, vector<64x16xf32>
    %cst_11 = arith.constant dense<0.000000e+00> : vector<8x16xf32>
    %20 = tpu.matmul %18, %19, %cst_11 {dimension_numbers = #tpu.dot_dimension_numbers<[1], [0], [0], [1], [0, 0, 1, 1], [], []>} : vector<8x64xf32>, vector<64x16xf32>, vector<8x16xf32> -> vector<8x16xf32>
    %c0_12 = arith.constant 0 : index
    %c0_13 = arith.constant 0 : index
    %21 = vector.load %arg5[%c0_12, %c0_13] : memref<1x16xf32, #tpu.memory_space<vmem>>, vector<1x16xf32>
    %22 = vector.broadcast %21 : vector<1x16xf32> to vector<8x16xf32>
    %23 = arith.addf %20, %22 : vector<8x16xf32>
    %c0_14 = arith.constant 0 : index
    %c0_15 = arith.constant 0 : index
    %24 = vector.load %arg6[%c0_14, %c0_15] : memref<8x16xf32, #tpu.memory_space<vmem>>, vector<8x16xf32>
    tpu.vector_store %arg6[%c0_14, %c0_15], %23 {strides = array<i32>} : memref<8x16xf32, #tpu.memory_space<vmem>>, vector<8x16xf32>,
    return
  }
  func.func @transform_0(%arg0: i32) -> (i32, i32) {
    %c0_i32 = arith.constant 0 : i32
    %c0_i32_0 = arith.constant 0 : i32
    return %arg0, %c0_i32 : i32, i32
  }
  func.func @transform_1(%arg0: i32) -> (i32, i32) {
    %c0_i32 = arith.constant 0 : i32
    %c0_i32_0 = arith.constant 0 : i32
    %c0_i32_1 = arith.constant 0 : i32
    return %c0_i32, %c0_i32_0 : i32, i32
  }
  func.func @transform_2(%arg0: i32) -> (i32, i32) {
    %c0_i32 = arith.constant 0 : i32
    %c0_i32_0 = arith.constant 0 : i32
    %c0_i32_1 = arith.constant 0 : i32
    return %c0_i32, %c0_i32_0 : i32, i32
  }
  func.func @transform_3(%arg0: i32) -> (i32, i32) {
    %c0_i32 = arith.constant 0 : i32
    %c0_i32_0 = arith.constant 0 : i32
    %c0_i32_1 = arith.constant 0 : i32
    return %c0_i32, %c0_i32_0 : i32, i32
  }
  func.func @transform_4(%arg0: i32) -> (i32, i32) {
    %c0_i32 = arith.constant 0 : i32
    %c0_i32_0 = arith.constant 0 : i32
    %c0_i32_1 = arith.constant 0 : i32
    return %c0_i32, %c0_i32_0 : i32, i32
  }
  func.func @transform_5(%arg0: i32) -> (i32, i32) {
    %c0_i32 = arith.constant 0 : i32
    %c0_i32_0 = arith.constant 0 : i32
    return %arg0, %c0_i32 : i32, i32
  }
}

</mosaic_0001>

<llo_original>
// kernel: tpu_custom_call.1
$region0: #{tpu_custom_call.1}
  #allocation0 [shape = 'u32[]', space=smem, size = 0x4, offset = 0x4, fixed_abs, tag = 'smem constant byte address 0x4 - core index']
  #allocation1 [shape = 'u32[144,128]{1,0:T(1,128)}', space=vmem, size = 0x12000, scoped, tag = 'internal scratch']
  %s0 = inlined_call_operand.vmem [shape: f32[8,32], index: 0, kind: input, shape index: {}]
  %s1 = inlined_call_operand.vmem [shape: f32[32,64], index: 1, kind: input, shape index: {}]
  %s2 = inlined_call_operand.vmem [shape: f32[1,64], index: 2, kind: input, shape index: {}]
  %s3 = inlined_call_operand.vmem [shape: f32[64,16], index: 3, kind: input, shape index: {}]
  %s4 = inlined_call_operand.vmem [shape: f32[1,16], index: 4, kind: input, shape index: {}]
  %s5 = inlined_call_operand.hbm [shape: f32[8,16], index: 5, kind: output, shape index: {}]
  %s6 = sld [smem:[#allocation0]]
  $region30: #{tpu_custom_call.1} parent=0
    _
  %s8 = ssub.s32 1, %s6
  %s9 = scalar_select 0, %s8, %s6
  $region1: #{tpu_custom_call.1} parent=0
    #allocation2 [shape = 'u8[4096]{0}', space=vmem, size = 0x1000, scoped, tag = 'output window, operand 0, single buffered']
    #allocation3 [shape = 's32[1]{0}', space=sflag, size = 0x4, scoped, tag = 'scoped memory for tpu_custom_call.1']
    %10 = vsyncpa [#allocation3], 0
    // Predicated region
    $region2: #{tpu_custom_call.1} parent=1 // pred_check
      _
    $region3: #{tpu_custom_call.1} parent=1 // pred_check_branch
      %12 = sbr.rel (0) target = $region5
    $region4: #{tpu_custom_call.1} parent=1 // pred_region
      _
    $region5: #{tpu_custom_call.1} parent=1 // pred_fallthru
      _
    // Predicated region
    $region6: #{tpu_custom_call.1} parent=1 // pred_check
      _
    $region7: #{tpu_custom_call.1} parent=1 // pred_check_branch
      %14 = sbr.rel (0) target = $region9
    $region8: #{tpu_custom_call.1} parent=1 // pred_region
      _
    $region9: #{tpu_custom_call.1} parent=1 // pred_fallthru
      _
    // Predicated region
    $region10: #{tpu_custom_call.1} parent=1 // pred_check
      _
    $region11: #{tpu_custom_call.1} parent=1 // pred_check_branch
      %16 = sbr.rel (0) target = $region13
    $region12: #{tpu_custom_call.1} parent=1 // pred_region
      _
    $region13: #{tpu_custom_call.1} parent=1 // pred_fallthru
      _
    // Predicated region
    $region14: #{tpu_custom_call.1} parent=1 // pred_check
      _
    $region15: #{tpu_custom_call.1} parent=1 // pred_check_branch
      %18 = sbr.rel (0) target = $region17
    $region16: #{tpu_custom_call.1} parent=1 // pred_region
      _
    $region17: #{tpu_custom_call.1} parent=1 // pred_fallthru
      _
    // Predicated region
    $region18: #{tpu_custom_call.1} parent=1 // pred_check
      _
    $region19: #{tpu_custom_call.1} parent=1 // pred_check_branch
      %20 = sbr.rel (0) target = $region21
    $region20: #{tpu_custom_call.1} parent=1 // pred_region
      _
    $region21: #{tpu_custom_call.1} parent=1 // pred_fallthru
      _
    %v21 = vld [vmem:[%s0] sm:$0xff]
    %v22 = vmul.f32 %v21, %v21
    %vm23 = vcmask 261120
    %v24 = vsel %vm23, %v22, 0.0
    %25 = vadd.xlane.f32.xlu0 %v24
    %v26 = vpop.xlane.xlu0 %25
    %v27 = vmax.f32 %v26, 1e-24
    %v28 = vrsqrt.pop %v27
    %v29 = vmul.f32 %v21, %v28
    %v30 = vld [vmem:[%s1] sm:$0xff]
    %v31 = vld [vmem:[%s1 + $0x8] sm:$0xff]
    %v32 = vld [vmem:[%s1 + $0x10] sm:$0xff]
    %v33 = vld [vmem:[%s1 + $0x18] sm:$0xff]
    %v34 = vld [vmem:[%s2] sm:$0x1]
    %v36 = vlaneseq
    %v37 = vshrl.u32 %v36, 7
    %v38 = vsub.s32 0, %v37
    %v39 = vrot.slane %v34, %v38
    %v42 = vsel %vm23, %v29, 0
    %44 = vmatprep.subr.mxu0 0.0
    %45 = vmatpush1.msra.mxu0 0.0
    %46 = vmatprep.subr.mxu0 0.0
    %47 = vmatpush1.msra.mxu0 0.0
    %48 = vmatprep.subr.mxu0 0.0
    %49 = vmatpush1.msra.mxu0 0.0
    %50 = vmatprep.subr.mxu0 0.0
    %51 = vmatpush1.msra.mxu0 0.0
    %52 = vmatprep.subr.mxu0 0.0
    %53 = vmatpush1.msra.mxu0 0.0
    %54 = vmatprep.subr.mxu0 0.0
    %55 = vmatpush1.msra.mxu0 0.0
    %56 = vmatprep.subr.mxu0 0.0
    %57 = vmatpush1.msra.mxu0 0.0
    %58 = vmatprep.subr.mxu0 0.0
    %59 = vmatpush1.msra.mxu0 0.0
    %60 = vmatprep.subr.mxu0 0.0
    %61 = vmatpush1.msra.mxu0 0.0
    %62 = vmatprep.subr.mxu0 0.0
    %63 = vmatpush1.msra.mxu0 0.0
    %64 = vmatprep.subr.mxu0 0.0
    %65 = vmatpush1.msra.mxu0 0.0
    %66 = vmatprep.subr.mxu0 0.0
    %67 = vmatpush1.msra.mxu0 0.0
    %68 = vmatprep.subr.mxu0 0.0
    %69 = vmatpush1.msra.mxu0 %v33
    %70 = vmatprep.subr.mxu0 0.0
    %71 = vmatpush1.msra.mxu0 %v32
    %72 = vmatprep.subr.mxu0 0.0
    %73 = vmatpush1.msra.mxu0 %v31
    %74 = vmatprep.subr.mxu0 0.0
    %75 = vmatpush1.msra.mxu0 %v30
    %76 = vmatprep.subr.mxu0 0.0
    %77 = vmatpush2.msra.mxu0 0.0
    %78 = vmatprep.subr.mxu0 0.0
    %79 = vmatpush2.msra.mxu0 0.0
    %80 = vmatprep.subr.mxu0 0.0
    %81 = vmatpush2.msra.mxu0 0.0
    %82 = vmatprep.subr.mxu0 0.0
    %83 = vmatpush2.msra.mxu0 0.0
    %84 = vmatprep.subr.mxu0 0.0
    %85 = vmatpush2.msra.mxu0 0.0
    %86 = vmatprep.subr.mxu0 0.0
    %87 = vmatpush2.msra.mxu0 0.0
    %88 = vmatprep.subr.mxu0 0.0
    %89 = vmatpush2.msra.mxu0 0.0
    %90 = vmatprep.subr.mxu0 0.0
    %91 = vmatpush2.msra.mxu0 0.0
    %92 = vmatprep.subr.mxu0 0.0
    %93 = vmatpush2.msra.mxu0 0.0
    %94 = vmatprep.subr.mxu0 0.0
    %95 = vmatpush2.msra.mxu0 0.0
    %96 = vmatprep.subr.mxu0 0.0
    %97 = vmatpush2.msra.mxu0 0.0
    %98 = vmatprep.subr.mxu0 0.0
    %99 = vmatpush2.msra.mxu0 0.0
    %100 = vmatprep.subr.mxu0 0.0
    %101 = vmatpush2.msra.mxu0 0.0
    %102 = vmatprep.subr.mxu0 0.0
    %103 = vmatpush2.msra.mxu0 0.0
    %104 = vmatprep.subr.mxu0 0.0
    %105 = vmatpush2.msra.mxu0 0.0
    %106 = vmatprep.subr.mxu0 0.0
    %107 = vmatpush2.msra.mxu0 0.0
    %108 = vmatprep.mubr.f32.mxu0 0.0
    %109 = vmatmul.mubr.f32.gmra.mxu0 %v42
    %v110 = vpop.f32.mrf.mxu0
    %v111 = vadd.f32 %v39, %v110
    %v112 = vpop.f32.mrf.mxu0
    %113 = vdwg.mxu0
    %vm114 = vcmp.ge.f32.partialorder %v111, 0.0
    %v115 = vmul.f32 %v111, 0.01
    %v116 = vsel %vm114, %v111, %v115
    %v117 = vld [vmem:[%s3] sm:$0xff]
    %v118 = vld [vmem:[%s3 + $0x8] sm:$0xff]
    %v119 = vld [vmem:[%s3 + $0x10] sm:$0xff]
    %v120 = vld [vmem:[%s3 + $0x18] sm:$0xff]
    %v121 = vld [vmem:[%s3 + $0x20] sm:$0xff]
    %v122 = vld [vmem:[%s3 + $0x28] sm:$0xff]
    %v123 = vld [vmem:[%s3 + $0x30] sm:$0xff]
    %v124 = vld [vmem:[%s3 + $0x38] sm:$0xff]
    %v125 = vld [vmem:[%s4] sm:$0x1]
    %v127 = vlaneseq
    %v128 = vshrl.u32 %v127, 7
    %v129 = vsub.s32 0, %v128
    %v130 = vrot.slane %v125, %v129
    %vm132 = vcmask 523264
    %v134 = vsel %vm132, %v116, 0
    %136 = vmatprep.subr.mxu0 0.0
    %137 = vmatpush1.msra.mxu0 0.0
    %138 = vmatprep.subr.mxu0 0.0
    %139 = vmatpush1.msra.mxu0 0.0
    %140 = vmatprep.subr.mxu0 0.0
    %141 = vmatpush1.msra.mxu0 0.0
    %142 = vmatprep.subr.mxu0 0.0
    %143 = vmatpush1.msra.mxu0 0.0
    %144 = vmatprep.subr.mxu0 0.0
    %145 = vmatpush1.msra.mxu0 0.0
    %146 = vmatprep.subr.mxu0 0.0
    %147 = vmatpush1.msra.mxu0 0.0
    %148 = vmatprep.subr.mxu0 0.0
    %149 = vmatpush1.msra.mxu0 0.0
    %150 = vmatprep.subr.mxu0 0.0
    %151 = vmatpush1.msra.mxu0 0.0
    %152 = vmatprep.subr.mxu0 0.0
    %153 = vmatpush1.msra.mxu0 %v124
    %154 = vmatprep.subr.mxu0 0.0
    %155 = vmatpush1.msra.mxu0 %v123
    %156 = vmatprep.subr.mxu0 0.0
    %157 = vmatpush1.msra.mxu0 %v122
    %158 = vmatprep.subr.mxu0 0.0
    %159 = vmatpush1.msra.mxu0 %v121
    %160 = vmatprep.subr.mxu0 0.0
    %161 = vmatpush1.msra.mxu0 %v120
    %162 = vmatprep.subr.mxu0 0.0
    %163 = vmatpush1.msra.mxu0 %v119
    %164 = vmatprep.subr.mxu0 0.0
    %165 = vmatpush1.msra.mxu0 %v118
    %166 = vmatprep.subr.mxu0 0.0
    %167 = vmatpush1.msra.mxu0 %v117
    %168 = vmatprep.subr.mxu0 0.0
    %169 = vmatpush2.msra.mxu0 0.0
    %170 = vmatprep.subr.mxu0 0.0
    %171 = vmatpush2.msra.mxu0 0.0
    %172 = vmatprep.subr.mxu0 0.0
    %173 = vmatpush2.msra.mxu0 0.0
    %174 = vmatprep.subr.mxu0 0.0
    %175 = vmatpush2.msra.mxu0 0.0
    %176 = vmatprep.subr.mxu0 0.0
    %177 = vmatpush2.msra.mxu0 0.0
    %178 = vmatprep.subr.mxu0 0.0
    %179 = vmatpush2.msra.mxu0 0.0
    %180 = vmatprep.subr.mxu0 0.0
    %181 = vmatpush2.msra.mxu0 0.0
    %182 = vmatprep.subr.mxu0 0.0
    %183 = vmatpush2.msra.mxu0 0.0
    %184 = vmatprep.subr.mxu0 0.0
    %185 = vmatpush2.msra.mxu0 0.0
    %186 = vmatprep.subr.mxu0 0.0
    %187 = vmatpush2.msra.mxu0 0.0
    %188 = vmatprep.subr.mxu0 0.0
    %189 = vmatpush2.msra.mxu0 0.0
    %190 = vmatprep.subr.mxu0 0.0
    %191 = vmatpush2.msra.mxu0 0.0
    %192 = vmatprep.subr.mxu0 0.0
    %193 = vmatpush2.msra.mxu0 0.0
    %194 = vmatprep.subr.mxu0 0.0
    %195 = vmatpush2.msra.mxu0 0.0
    %196 = vmatprep.subr.mxu0 0.0
    %197 = vmatpush2.msra.mxu0 0.0
    %198 = vmatprep.subr.mxu0 0.0
    %199 = vmatpush2.msra.mxu0 0.0
    %200 = vmatprep.mubr.f32.mxu0 0.0
    %201 = vmatmul.mubr.f32.gmra.mxu0 %v134
    %v202 = vpop.f32.mrf.mxu0
    %v203 = vadd.f32 %v130, %v202
    %v204 = vpop.f32.mrf.mxu0
    %205 = vdwg.mxu0
    %vm206 = vcmask 130048
    %207 = vst.msk [vmem:[#allocation2] sm:$0xff] %vm206, %v203
    // Predicated region
    $region22: #{tpu_custom_call.1} parent=1 // pred_check
      _
    $region23: #{tpu_custom_call.1} parent=1 // pred_check_branch
      %209 = sbr.rel (0) target = $region25
    $region24: #{tpu_custom_call.1} parent=1 // pred_region
      %s211 = ssub.s32 128, 128
      %212 = vsyncadd [#allocation3], %s211
      %s214 = sshll.u32 [#allocation2], 4
      %s215 = int_to_ptr.vmem [resolvable:$true] %s214
      %217 = dma.vmem_to_hbm [thread:$0]  %s215, 128, %s5, [#allocation3]
    $region25: #{tpu_custom_call.1} parent=1 // pred_fallthru
      _
    // Predicated region
    $region26: #{tpu_custom_call.1} parent=1 // pred_check
      _
    $region27: #{tpu_custom_call.1} parent=1 // pred_check_branch
      %219 = sbr.rel (0) target = $region29
    $region28: #{tpu_custom_call.1} parent=1 // pred_region
      %220 = dma.done [#allocation3], 128
    $region29: #{tpu_custom_call.1} parent=1 // pred_fallthru
      _
    %221 = vsyncpa [#allocation3], 1

</llo_original>
